<compile_context>
chip_gen: v7x
topology: tpu7x:2x2x1
jax: 0.10.0
libtpu: 0.0.40
codegen_flags: <defaults>
</compile_context>

<pallas_src>
import functools

import jax
import jax.numpy as jnp
from jax import lax
from jax.experimental import pallas as pl
from jax.experimental.pallas import tpu as pltpu


def _out_len(L, K, stride, dilation, padding):
    """PyTorch Conv1d output length."""
    return (L + 2 * padding - dilation * (K - 1) - 1) // stride + 1


def _round8(c):
    return -(-c // 8) * 8


def _pick_b_tile(N, C_in, C_out, L1_pad, in_itemsize, out_itemsize,
                 budget_bytes=8 << 20, cap=32):
    """Largest divisor of N (<= cap) whose VMEM slabs fit a conservative
    budget, keeping the grid >= 2 steps (when N >= 2) so both v7x
    TensorCores get work under 'parallel' sharding."""
    per_b = L1_pad * (
        2 * _round8(C_in) * in_itemsize       # double-buffered input block
        + _round8(C_out) * in_itemsize        # hcat scratch
        + 2 * _round8(C_out) * out_itemsize   # double-buffered output block
    )
    best = 1
    for bt in range(1, min(N, cap) + 1):
        if N % bt:
            continue
        if N >= 2 and N // bt < 2:            # keep >= 2 grid steps
            continue
        if bt * per_b > budget_bytes:
            continue
        best = bt
    return best


def _make_kernel(*, C_in, C_out, K, dilation, padding, Wx, W1):
    pad = padding
    d = dilation
    tail = pad + d * (K - 1)     # trailing zero strip of the conv2 input slab

    def kernel(x_ref, mask_ref, w1_ref, b1_ref, w2_ref, b2_ref, o_ref, hcat_ref):
        # x_ref   : (C_in, Wx)   padded, batch-concatenated input (compute dtype)
        # mask_ref: (1, W1)      1.0 on valid conv1 output columns, 0.0 on gaps
        # w1_ref  : (K, C_out, C_in)    b1_ref: (C_out, 1)
        # w2_ref  : (K, C_out, C_out)   b2_ref: (C_out, 1)
        # o_ref   : (C_out, Wx)  conv2 output in "spread" segment layout
        # hcat_ref: VMEM (C_out, Wx + d*(K-1)) conv2 input slab (compute dtype)

        # ---- conv1: ONE wide dot per tap across all b_tile batch rows -----
        acc1 = jnp.zeros((C_out, W1), jnp.float32)
        for k in range(K):                    # K is small (e.g. 3): unrolled
            xk = x_ref[:, pl.ds(k * d, W1)]
            acc1 = acc1 + jnp.dot(w1_ref[k], xk,
                                  preferred_element_type=jnp.float32)
        h = jnp.maximum(acc1 + b1_ref[...], 0.0)       # bias + ReLU (once)
        # Zero the inter-batch pad gaps in-register (replaces slab zeroing).
        h = jnp.where(mask_ref[...] > 0.5, h, 0.0)
        hcat_ref[:, pl.ds(pad, W1)] = h.astype(hcat_ref.dtype)

        # Only the two narrow edge strips still need zeroing each grid step.
        if pad > 0:
            hcat_ref[:, pl.ds(0, pad)] = jnp.zeros((C_out, pad), hcat_ref.dtype)
        if tail > 0:
            hcat_ref[:, pl.ds(pad + W1, tail)] = jnp.zeros((C_out, tail),
                                                           hcat_ref.dtype)

        # ---- conv2: again one wide dot per tap --------------------------
        acc2 = jnp.zeros((C_out, Wx), jnp.float32)
        for k in range(K):
            hk = hcat_ref[:, pl.ds(k * d, Wx)]
            acc2 = acc2 + jnp.dot(w2_ref[k], hk,
                                  preferred_element_type=jnp.float32)
        y = jnp.maximum(acc2 + b2_ref[...], 0.0)
        o_ref[...] = y.astype(o_ref.dtype)             # one wide lane-dense store

    return kernel


def temporal_block_forward(x_ncl, params, *, stride, dilation, padding,
                           b_tile=None, compute_dtype=jnp.float32):
    """Fused TemporalBlock forward.  x_ncl is NCL (PyTorch); returns NCL.

    compute_dtype=jnp.bfloat16 feeds native-rate bf16 operands to the MXU
    (accumulation / bias / ReLU stay f32)."""
    N, C_in, L = x_ncl.shape
    w1, b1, w2, b2 = params["w1"], params["b1"], params["w2"], params["b2"]
    C_out, C_in_w, K = w1.shape
    assert C_in_w == C_in and w2.shape == (C_out, C_out, K)
    assert stride == 1, "fused TCN kernel supports stride=1 (TCN default)"
    assert 2 * padding >= dilation * (K - 1), (
        "fused layout requires 2*padding >= dilation*(K-1) (standard TCN)")

    pad, d = padding, dilation
    L1 = _out_len(L, K, 1, d, pad)            # conv1 output length
    L2 = _out_len(L1, K, 1, d, pad)           # conv2 output length
    L1_pad = L1 + 2 * pad                     # per-batch segment stride

    in_itemsize = jnp.dtype(compute_dtype).itemsize
    out_itemsize = jnp.dtype(x_ncl.dtype).itemsize
    if b_tile is None:
        b_tile = _pick_b_tile(N, C_in, C_out, L1_pad, in_itemsize, out_itemsize)
    assert N % b_tile == 0, "batch must be divisible by b_tile"
    G = N // b_tile                           # grid length
    Wx = b_tile * L1_pad                      # input/output slab lane width
    W1 = Wx - 2 * pad                         # conv1 computed positions
    Wh = Wx + d * (K - 1)                     # conv2 input slab width

    # ---- wrapper-side layout plumbing (lane-dense slabs for the kernel) ----
    # Input: (N, C_in, L) -> (G, C_in, b_tile*L1_pad), each batch element a
    # zero-padded segment of width L1_pad along the lane axis.
    xt = jnp.transpose(x_ncl, (1, 0, 2))                               # (C_in, N, L)
    xt = jnp.pad(xt, ((0, 0), (0, 0), (pad, L1_pad - L - pad)))        # (C_in, N, L1_pad)
    x_in = jnp.transpose(xt.reshape(C_in, G, Wx), (1, 0, 2)).astype(compute_dtype)

    # Valid-column mask for conv1 outputs (zeroes the inter-batch pad gaps).
    pos = jnp.arange(W1, dtype=jnp.int32) % L1_pad
    mask = (pos < L1).astype(jnp.float32).reshape(1, W1)

    # Weights: (C_out, C_in, K) -> (K, C_out, C_in), one matrix per tap.
    w1_k = jnp.transpose(w1, (2, 0, 1)).astype(compute_dtype)
    w2_k = jnp.transpose(w2, (2, 0, 1)).astype(compute_dtype)
    b1c = b1.reshape(C_out, 1).astype(jnp.float32)
    b2c = b2.reshape(C_out, 1).astype(jnp.float32)

    kernel = _make_kernel(C_in=C_in, C_out=C_out, K=K, dilation=d,
                          padding=pad, Wx=Wx, W1=W1)

    out = pl.pallas_call(
        kernel,
        out_shape=jax.ShapeDtypeStruct((G, C_out, Wx), x_ncl.dtype),
        grid_spec=pltpu.PrefetchScalarGridSpec(
            num_scalar_prefetch=0,
            grid=(G,),
            in_specs=[
                pl.BlockSpec((None, C_in, Wx), lambda n: (n, 0, 0)),
                pl.BlockSpec((1, W1), lambda n: (0, 0)),
                pl.BlockSpec((K, C_out, C_in), lambda n: (0, 0, 0)),
                pl.BlockSpec((C_out, 1), lambda n: (0, 0)),
                pl.BlockSpec((K, C_out, C_out), lambda n: (0, 0, 0)),
                pl.BlockSpec((C_out, 1), lambda n: (0, 0)),
            ],
            out_specs=pl.BlockSpec((None, C_out, Wx), lambda n: (n, 0, 0)),
            scratch_shapes=[pltpu.VMEM((C_out, Wh), compute_dtype)],
        ),
        compiler_params=pltpu.CompilerParams(
            dimension_semantics=("parallel",),
            vmem_limit_bytes=32 * 1024 * 1024),
    )(x_in, mask, w1_k, b1c, w2_k, b2c)

    # Extract the valid columns of each segment: (G, C_out, Wx) -> (N, C_out, L2).
    out = out.reshape(G, C_out, b_tile, L1_pad)
    out = jnp.transpose(out, (0, 2, 1, 3)).reshape(N, C_out, L1_pad)
    return out[:, :, :L2]


def _reference_forward(x_ncl, params, *, stride, dilation, padding):
    """Pure-JAX reference using lax.conv_general_dilated (PyTorch semantics)."""
    def conv(x, w, b):
        y = lax.conv_general_dilated(
            x, w,
            window_strides=(stride,),
            padding=[(padding, padding)],
            rhs_dilation=(dilation,),
            dimension_numbers=("NCH", "OIH", "NCH"),
            precision=lax.Precision.HIGHEST)
        return jnp.maximum(y + b[None, :, None], 0.0)
    h = conv(x_ncl, params["w1"], params["b1"])
    h = conv(h, params["w2"], params["b2"])
    return h


def _init_params(key, n_inputs, n_outputs, kernel_size):
    """Deterministic init mimicking PyTorch Conv1d default (uniform +/- 1/sqrt(fan_in))."""
    k1, k2, k3, k4 = jax.random.split(key, 4)
    bound1 = 1.0 / (n_inputs * kernel_size) ** 0.5
    bound2 = 1.0 / (n_outputs * kernel_size) ** 0.5
    return {
        "w1": jax.random.uniform(k1, (n_outputs, n_inputs, kernel_size),
                                 jnp.float32, -bound1, bound1),
        "b1": jax.random.uniform(k2, (n_outputs,), jnp.float32, -bound1, bound1),
        "w2": jax.random.uniform(k3, (n_outputs, n_outputs, kernel_size),
                                 jnp.float32, -bound2, bound2),
        "b2": jax.random.uniform(k4, (n_outputs,), jnp.float32, -bound2, bound2),
    }


if __name__ == "__main__":
    # Config 1: TemporalBlock(n_inputs=4, n_outputs=8, kernel_size=3, stride=1,
    #                         dilation=2, padding=(3-1)*2=4) -- dropout = identity.
    n_inputs, n_outputs, kernel_size = 4, 8, 3
    stride, dilation = 1, 2
    padding = (kernel_size - 1) * dilation
    batch, seq_len = 2, 16

    key = jax.random.PRNGKey(0)
    kx, kp = jax.random.split(key)
    x = jax.random.normal(kx, (batch, n_inputs, seq_len), jnp.float32)   # NCL
    params = _init_params(kp, n_inputs, n_outputs, kernel_size)

    fwd = functools.partial(temporal_block_forward,
                            stride=stride, dilation=dilation, padding=padding)
    out = jax.block_until_ready(jax.jit(fwd)(x, params))
    ref = _reference_forward(x, params,
                             stride=stride, dilation=dilation, padding=padding)
    assert out.shape == ref.shape, (out.shape, ref.shape)
    assert jnp.allclose(out, ref, atol=2e-4, rtol=2e-4), "f32 mismatch (config 1)"

    # Config 2: exercises b_tile > 1 (batch-merged lane-dense dots), odd channels.
    ni2, no2, K2, d2 = 3, 5, 3, 1
    pad2 = (K2 - 1) * d2
    batch2, L2cfg = 8, 40
    kx2, kp2 = jax.random.split(jax.random.PRNGKey(1))
    x2 = jax.random.normal(kx2, (batch2, ni2, L2cfg), jnp.float32)
    params2 = _init_params(kp2, ni2, no2, K2)
    fwd2 = functools.partial(temporal_block_forward,
                             stride=1, dilation=d2, padding=pad2)
    out2 = jax.block_until_ready(jax.jit(fwd2)(x2, params2))
    ref2 = _reference_forward(x2, params2, stride=1, dilation=d2, padding=pad2)
    assert out2.shape == ref2.shape, (out2.shape, ref2.shape)
    assert jnp.allclose(out2, ref2, atol=2e-4, rtol=2e-4), "f32 mismatch (config 2)"

    # Config 1 again with bf16 MXU operands (f32 accumulation) -- loose tolerance.
    fwd_bf16 = functools.partial(fwd, compute_dtype=jnp.bfloat16)
    out_bf16 = jax.block_until_ready(jax.jit(fwd_bf16)(x, params))
    assert jnp.allclose(out_bf16, ref, atol=1e-1, rtol=1e-1), "bf16 mismatch"

    print("KERNEL_OK")
</pallas_src>

<mosaic_0001>
module attributes {stable_mosaic.version = 11 : i64} {
  func.func @kernel(%arg0: i32, %arg1: memref<1x4x28xf32, #tpu.memory_space<vmem>>, %arg2: memref<1x20xf32, #tpu.memory_space<vmem>>, %arg3: memref<3x8x4xf32, #tpu.memory_space<vmem>>, %arg4: memref<8x1xf32, #tpu.memory_space<vmem>>, %arg5: memref<3x8x8xf32, #tpu.memory_space<vmem>>, %arg6: memref<8x1xf32, #tpu.memory_space<vmem>>, %arg7: memref<1x8x28xf32, #tpu.memory_space<vmem>>, %arg8: memref<8x32xf32, #tpu.memory_space<vmem>>) attributes {dimension_semantics = [#tpu.dimension_semantics<parallel>], iteration_bounds = array<i64: 2>, scalar_prefetch = 0 : i64, scratch_operands = 1 : i64, tpu.core_type = #tpu.core_type<tc>, window_params = [{transform_indices = @transform_0, window_bounds = array<i64: 1, 4, 28>}, {pipeline_mode = #tpu.pipeline_mode<synchronous>, transform_indices = @transform_1, window_bounds = array<i64: 1, 20>}, {pipeline_mode = #tpu.pipeline_mode<synchronous>, transform_indices = @transform_2, window_bounds = array<i64: 3, 8, 4>}, {pipeline_mode = #tpu.pipeline_mode<synchronous>, transform_indices = @transform_3, window_bounds = array<i64: 8, 1>}, {pipeline_mode = #tpu.pipeline_mode<synchronous>, transform_indices = @transform_4, window_bounds = array<i64: 3, 8, 8>}, {pipeline_mode = #tpu.pipeline_mode<synchronous>, transform_indices = @transform_5, window_bounds = array<i64: 8, 1>}, {transform_indices = @transform_6, window_bounds = array<i64: 1, 8, 28>}]} {
    %cst = arith.constant 0.000000e+00 : f32
    %0 = vector.broadcast %cst : f32 to vector<8x20xf32>
    %c0 = arith.constant 0 : index
    %c0_0 = arith.constant 0 : index
    %c0_1 = arith.constant 0 : index
    %1 = vector.load %arg1[%c0, %c0_0, %c0_1] : memref<1x4x28xf32, #tpu.memory_space<vmem>>, vector<1x4x20xf32>
    %2 = vector.shape_cast %1 : vector<1x4x20xf32> to vector<4x20xf32>
    %c0_2 = arith.constant 0 : index
    %c0_3 = arith.constant 0 : index
    %c0_4 = arith.constant 0 : index
    %3 = vector.load %arg3[%c0_2, %c0_3, %c0_4] : memref<3x8x4xf32, #tpu.memory_space<vmem>>, vector<1x8x4xf32>
    %4 = vector.shape_cast %3 : vector<1x8x4xf32> to vector<8x4xf32>
    %cst_5 = arith.constant dense<0.000000e+00> : vector<8x20xf32>
    %5 = tpu.matmul %4, %2, %cst_5 {dimension_numbers = #tpu.dot_dimension_numbers<[1], [0], [0], [1], [0, 0, 1, 1], [], []>} : vector<8x4xf32>, vector<4x20xf32>, vector<8x20xf32> -> vector<8x20xf32>
    %6 = arith.addf %0, %5 : vector<8x20xf32>
    %c0_6 = arith.constant 0 : index
    %c0_7 = arith.constant 0 : index
    %c2 = arith.constant 2 : index
    %7 = vector.load %arg1[%c0_6, %c0_7, %c2] : memref<1x4x28xf32, #tpu.memory_space<vmem>>, vector<1x4x20xf32>
    %8 = vector.shape_cast %7 : vector<1x4x20xf32> to vector<4x20xf32>
    %c1 = arith.constant 1 : index
    %c0_8 = arith.constant 0 : index
    %c0_9 = arith.constant 0 : index
    %9 = vector.load %arg3[%c1, %c0_8, %c0_9] : memref<3x8x4xf32, #tpu.memory_space<vmem>>, vector<1x8x4xf32>
    %10 = vector.shape_cast %9 : vector<1x8x4xf32> to vector<8x4xf32>
    %cst_10 = arith.constant dense<0.000000e+00> : vector<8x20xf32>
    %11 = tpu.matmul %10, %8, %cst_10 {dimension_numbers = #tpu.dot_dimension_numbers<[1], [0], [0], [1], [0, 0, 1, 1], [], []>} : vector<8x4xf32>, vector<4x20xf32>, vector<8x20xf32> -> vector<8x20xf32>
    %12 = arith.addf %6, %11 : vector<8x20xf32>
    %c0_11 = arith.constant 0 : index
    %c0_12 = arith.constant 0 : index
    %c4 = arith.constant 4 : index
    %13 = vector.load %arg1[%c0_11, %c0_12, %c4] : memref<1x4x28xf32, #tpu.memory_space<vmem>>, vector<1x4x20xf32>
    %14 = vector.shape_cast %13 : vector<1x4x20xf32> to vector<4x20xf32>
    %c2_13 = arith.constant 2 : index
    %c0_14 = arith.constant 0 : index
    %c0_15 = arith.constant 0 : index
    %15 = vector.load %arg3[%c2_13, %c0_14, %c0_15] : memref<3x8x4xf32, #tpu.memory_space<vmem>>, vector<1x8x4xf32>
    %16 = vector.shape_cast %15 : vector<1x8x4xf32> to vector<8x4xf32>
    %cst_16 = arith.constant dense<0.000000e+00> : vector<8x20xf32>
    %17 = tpu.matmul %16, %14, %cst_16 {dimension_numbers = #tpu.dot_dimension_numbers<[1], [0], [0], [1], [0, 0, 1, 1], [], []>} : vector<8x4xf32>, vector<4x20xf32>, vector<8x20xf32> -> vector<8x20xf32>
    %18 = arith.addf %12, %17 : vector<8x20xf32>
    %c0_17 = arith.constant 0 : index
    %c0_18 = arith.constant 0 : index
    %19 = vector.load %arg4[%c0_17, %c0_18] : memref<8x1xf32, #tpu.memory_space<vmem>>, vector<8x1xf32>
    %20 = vector.broadcast %19 : vector<8x1xf32> to vector<8x20xf32>
    %21 = arith.addf %18, %20 : vector<8x20xf32>
    %cst_19 = arith.constant 0.000000e+00 : f32
    %22 = vector.broadcast %cst_19 : f32 to vector<8x20xf32>
    %23 = arith.maximumf %21, %22 : vector<8x20xf32>
    %c0_20 = arith.constant 0 : index
    %c0_21 = arith.constant 0 : index
    %24 = vector.load %arg2[%c0_20, %c0_21] : memref<1x20xf32, #tpu.memory_space<vmem>>, vector<1x20xf32>
    %cst_22 = arith.constant 5.000000e-01 : f32
    %25 = vector.broadcast %cst_22 : f32 to vector<1x20xf32>
    %26 = arith.cmpf ogt, %24, %25 : vector<1x20xf32>
    %cst_23 = arith.constant 0.000000e+00 : f32
    %27 = vector.shape_cast %26 : vector<1x20xi1> to vector<1x20xi1>
    %28 = vector.broadcast %27 : vector<1x20xi1> to vector<8x20xi1>
    %29 = vector.broadcast %cst_23 : f32 to vector<8x20xf32>
    %30 = arith.select %28, %23, %29 : vector<8x20xi1>, vector<8x20xf32>
    %c0_24 = arith.constant 0 : index
    %c4_25 = arith.constant 4 : index
    %31 = vector.load %arg8[%c0_24, %c4_25] : memref<8x32xf32, #tpu.memory_space<vmem>>, vector<8x20xf32>
    tpu.vector_store %arg8[%c0_24, %c4_25], %30 {strides = array<i32>} : memref<8x32xf32, #tpu.memory_space<vmem>>, vector<8x20xf32>,
    %cst_26 = arith.constant 0.000000e+00 : f32
    %32 = vector.broadcast %cst_26 : f32 to vector<8x4xf32>
    %c0_27 = arith.constant 0 : index
    %c0_28 = arith.constant 0 : index
    %33 = vector.load %arg8[%c0_27, %c0_28] : memref<8x32xf32, #tpu.memory_space<vmem>>, vector<8x4xf32>
    tpu.vector_store %arg8[%c0_27, %c0_28], %32 {strides = array<i32>} : memref<8x32xf32, #tpu.memory_space<vmem>>, vector<8x4xf32>,
    %cst_29 = arith.constant 0.000000e+00 : f32
    %34 = vector.broadcast %cst_29 : f32 to vector<8x8xf32>
    %c0_30 = arith.constant 0 : index
    %c24 = arith.constant 24 : index
    %35 = vector.load %arg8[%c0_30, %c24] : memref<8x32xf32, #tpu.memory_space<vmem>>, vector<8x8xf32>
    tpu.vector_store %arg8[%c0_30, %c24], %34 {strides = array<i32>} : memref<8x32xf32, #tpu.memory_space<vmem>>, vector<8x8xf32>,
    %cst_31 = arith.constant 0.000000e+00 : f32
    %36 = vector.broadcast %cst_31 : f32 to vector<8x28xf32>
    %c0_32 = arith.constant 0 : index
    %c0_33 = arith.constant 0 : index
    %37 = vector.load %arg8[%c0_32, %c0_33] : memref<8x32xf32, #tpu.memory_space<vmem>>, vector<8x28xf32>
    %c0_34 = arith.constant 0 : index
    %c0_35 = arith.constant 0 : index
    %c0_36 = arith.constant 0 : index
    %38 = vector.load %arg5[%c0_34, %c0_35, %c0_36] : memref<3x8x8xf32, #tpu.memory_space<vmem>>, vector<1x8x8xf32>
    %39 = vector.shape_cast %38 : vector<1x8x8xf32> to vector<8x8xf32>
    %cst_37 = arith.constant dense<0.000000e+00> : vector<8x28xf32>
    %40 = tpu.matmul %39, %37, %cst_37 {dimension_numbers = #tpu.dot_dimension_numbers<[1], [0], [0], [1], [0, 0, 1, 1], [], []>} : vector<8x8xf32>, vector<8x28xf32>, vector<8x28xf32> -> vector<8x28xf32>
    %41 = arith.addf %36, %40 : vector<8x28xf32>
    %c0_38 = arith.constant 0 : index
    %c2_39 = arith.constant 2 : index
    %42 = vector.load %arg8[%c0_38, %c2_39] : memref<8x32xf32, #tpu.memory_space<vmem>>, vector<8x28xf32>
    %c1_40 = arith.constant 1 : index
    %c0_41 = arith.constant 0 : index
    %c0_42 = arith.constant 0 : index
    %43 = vector.load %arg5[%c1_40, %c0_41, %c0_42] : memref<3x8x8xf32, #tpu.memory_space<vmem>>, vector<1x8x8xf32>
    %44 = vector.shape_cast %43 : vector<1x8x8xf32> to vector<8x8xf32>
    %cst_43 = arith.constant dense<0.000000e+00> : vector<8x28xf32>
    %45 = tpu.matmul %44, %42, %cst_43 {dimension_numbers = #tpu.dot_dimension_numbers<[1], [0], [0], [1], [0, 0, 1, 1], [], []>} : vector<8x8xf32>, vector<8x28xf32>, vector<8x28xf32> -> vector<8x28xf32>
    %46 = arith.addf %41, %45 : vector<8x28xf32>
    %c0_44 = arith.constant 0 : index
    %c4_45 = arith.constant 4 : index
    %47 = vector.load %arg8[%c0_44, %c4_45] : memref<8x32xf32, #tpu.memory_space<vmem>>, vector<8x28xf32>
    %c2_46 = arith.constant 2 : index
    %c0_47 = arith.constant 0 : index
    %c0_48 = arith.constant 0 : index
    %48 = vector.load %arg5[%c2_46, %c0_47, %c0_48] : memref<3x8x8xf32, #tpu.memory_space<vmem>>, vector<1x8x8xf32>
    %49 = vector.shape_cast %48 : vector<1x8x8xf32> to vector<8x8xf32>
    %cst_49 = arith.constant dense<0.000000e+00> : vector<8x28xf32>
    %50 = tpu.matmul %49, %47, %cst_49 {dimension_numbers = #tpu.dot_dimension_numbers<[1], [0], [0], [1], [0, 0, 1, 1], [], []>} : vector<8x8xf32>, vector<8x28xf32>, vector<8x28xf32> -> vector<8x28xf32>
    %51 = arith.addf %46, %50 : vector<8x28xf32>
    %c0_50 = arith.constant 0 : index
    %c0_51 = arith.constant 0 : index
    %52 = vector.load %arg6[%c0_50, %c0_51] : memref<8x1xf32, #tpu.memory_space<vmem>>, vector<8x1xf32>
    %53 = vector.broadcast %52 : vector<8x1xf32> to vector<8x28xf32>
    %54 = arith.addf %51, %53 : vector<8x28xf32>
    %cst_52 = arith.constant 0.000000e+00 : f32
    %55 = vector.broadcast %cst_52 : f32 to vector<8x28xf32>
    %56 = arith.maximumf %54, %55 : vector<8x28xf32>
    %c0_53 = arith.constant 0 : index
    %c0_54 = arith.constant 0 : index
    %c0_55 = arith.constant 0 : index
    %57 = vector.load %arg7[%c0_53, %c0_54, %c0_55] : memref<1x8x28xf32, #tpu.memory_space<vmem>>, vector<1x8x28xf32>
    %58 = vector.shape_cast %57 : vector<1x8x28xf32> to vector<8x28xf32>
    %59 = vector.shape_cast %56 : vector<8x28xf32> to vector<1x8x28xf32>
    tpu.vector_store %arg7[%c0_53, %c0_54, %c0_55], %59 {strides = array<i32>} : memref<1x8x28xf32, #tpu.memory_space<vmem>>, vector<1x8x28xf32>,
    return
  }
  func.func @transform_0(%arg0: i32) -> (i32, i32, i32) {
    %c0_i32 = arith.constant 0 : i32
    %c0_i32_0 = arith.constant 0 : i32
    %c0_i32_1 = arith.constant 0 : i32
    return %arg0, %c0_i32, %c0_i32_0 : i32, i32, i32
  }
  func.func @transform_1(%arg0: i32) -> (i32, i32) {
    %c0_i32 = arith.constant 0 : i32
    %c0_i32_0 = arith.constant 0 : i32
    %c0_i32_1 = arith.constant 0 : i32
    return %c0_i32, %c0_i32_0 : i32, i32
  }
  func.func @transform_2(%arg0: i32) -> (i32, i32, i32) {
    %c0_i32 = arith.constant 0 : i32
    %c0_i32_0 = arith.constant 0 : i32
    %c0_i32_1 = arith.constant 0 : i32
    %c0_i32_2 = arith.constant 0 : i32
    return %c0_i32, %c0_i32_0, %c0_i32_1 : i32, i32, i32
  }
  func.func @transform_3(%arg0: i32) -> (i32, i32) {
    %c0_i32 = arith.constant 0 : i32
    %c0_i32_0 = arith.constant 0 : i32
    %c0_i32_1 = arith.constant 0 : i32
    return %c0_i32, %c0_i32_0 : i32, i32
  }
  func.func @transform_4(%arg0: i32) -> (i32, i32, i32) {
    %c0_i32 = arith.constant 0 : i32
    %c0_i32_0 = arith.constant 0 : i32
    %c0_i32_1 = arith.constant 0 : i32
    %c0_i32_2 = arith.constant 0 : i32
    return %c0_i32, %c0_i32_0, %c0_i32_1 : i32, i32, i32
  }
  func.func @transform_5(%arg0: i32) -> (i32, i32) {
    %c0_i32 = arith.constant 0 : i32
    %c0_i32_0 = arith.constant 0 : i32
    %c0_i32_1 = arith.constant 0 : i32
    return %c0_i32, %c0_i32_0 : i32, i32
  }
  func.func @transform_6(%arg0: i32) -> (i32, i32, i32) {
    %c0_i32 = arith.constant 0 : i32
    %c0_i32_0 = arith.constant 0 : i32
    %c0_i32_1 = arith.constant 0 : i32
    return %arg0, %c0_i32, %c0_i32_0 : i32, i32, i32
  }
}

</mosaic_0001>

<llo_original>
// kernel: temporal_block_forward.1
$region0: #{temporal_block_forward.1}
  #allocation0 [shape = 'u32[]', space=smem, size = 0x4, offset = 0x4, fixed_abs, tag = 'smem constant byte address 0x4 - core index']
  #allocation1 [shape = 'u32[144,128]{1,0:T(1,128)}', space=vmem, size = 0x12000, scoped, tag = 'internal scratch']
  #allocation2 [shape = 'f32[8,32]{1,0:T(8,128)}', space=vmem, size = 0x1000, scoped, tag = 'scratch operand']
  %s0 = inlined_call_operand.vmem [shape: f32[2,4,28], index: 0, kind: input, shape index: {}]
  %s1 = inlined_call_operand.vmem [shape: f32[1,20], index: 1, kind: input, shape index: {}]
  %s2 = inlined_call_operand.vmem [shape: f32[3,8,4], index: 2, kind: input, shape index: {}]
  %s3 = inlined_call_operand.vmem [shape: f32[8,1], index: 3, kind: input, shape index: {}]
  %s4 = inlined_call_operand.vmem [shape: f32[3,8,8], index: 4, kind: input, shape index: {}]
  %s5 = inlined_call_operand.vmem [shape: f32[8,1], index: 5, kind: input, shape index: {}]
  %s6 = inlined_call_operand.hbm [shape: f32[2,8,28], index: 6, kind: output, shape index: {}]
  %s7 = sld [smem:[#allocation0]]
  $region57: #{temporal_block_forward.1} parent=0
    _
  %s9 = ssub.s32 1, %s7
  %s10 = scalar_select 0, %s9, %s7
  $region1: #{temporal_block_forward.1} parent=0
    #allocation3 [shape = 'u8[8192]{0}', space=vmem, size = 0x2000, scoped, tag = 'output window, operand 0']
    #allocation4 [shape = 's32[2]{0}', space=sflag, size = 0x8, scoped, tag = 'scoped memory for temporal_block_forward.1']
    %11 = vsyncpa [#allocation4], 0
    %s12 = scalar_lea.sflag [#allocation4], 1
    %13 = vsyncpa %s12, 0
    loop: start=0, step=1, limit=4
    $region2: #{temporal_block_forward.1} parent=1 // loop_pre_header
      _
    $region3: #{temporal_block_forward.1} parent=1 // loop_header
      %s15 = sphi 0, %s19
      %p16 = scmp.ge.s32.totalorder %s15, 4
      %s25 = sphi 0, %s27
      %s28 = sphi 0, %s25
      %s29 = sphi 0, %s28
      %s45 = sphi 0, %s29
      %s49 = sphi 0, %s49
      %s51 = sphi 0, %s49
      %s52 = sphi 0, %s51
      %s66 = sphi 0, %s52
      %s70 = sphi 0, %s70
      %s72 = sphi 0, %s70
      %s73 = sphi 0, %s72
      %s87 = sphi 0, %s73
      %s91 = sphi 0, %s91
      %s93 = sphi 0, %s91
      %s94 = sphi 0, %s93
      %s108 = sphi 0, %s94
      %s112 = sphi 0, %s112
      %s114 = sphi 0, %s112
      %s115 = sphi 0, %s114
      %s129 = sphi 0, %s115
      %s133 = sphi 0, %s133
      %s135 = sphi 0, %s133
      %s136 = sphi 0, %s135
      %s150 = sphi 0, %s136
      %s156 = sphi 0, %s158
      %s159 = sphi 0, %s156
      %s160 = sphi 0, %s159
      %s176 = sphi 0, %s160
    $region4: #{temporal_block_forward.1} parent=1 // loop_header_branch
      %18 = sbr.rel (%p16) target = $region8
    $region5: #{temporal_block_forward.1} parent=1 // loop_body
      %s20 = ssub.s32 %s15, 1
      %s21 = ssub.s32 %s15, 2
      %s22 = sadd.s32 %s15, 1
      %s23 = ssub.s32 %s15, %s22
      %p24 = scmp.eq.s32.totalorder %s23, 0
      %s26 = sadd.s32 %s25, 1
      %s27 = scalar_select %p24, %s25, %s26
      %p30 = pneg %p24
      %p31 = scmp.eq.s32.totalorder %s15, 1
      %p32 = por %p30, %p31
      %p33 = scmp.ne.s32.totalorder %s25, %s28
      %p34 = scmp.eq.s32.totalorder %s15, 0
      %p35 = por %p33, %p34
      %p36 = scmp.ne.s32.totalorder %s25, %s28
      %p37 = scmp.eq.s32.totalorder %s20, 1
      %p38 = por %p36, %p37
      %p39 = scmp.ne.s32.totalorder %s28, %s29
      %p40 = scmp.eq.s32.totalorder %s20, 0
      %p41 = por %p39, %p40
      %p42 = scmp.ne.s32.totalorder %s28, %s29
      %p43 = scmp.eq.s32.totalorder %s21, 1
      %p44 = por %p42, %p43
      %p46 = scmp.ne.s32.totalorder %s29, %s45
      %p47 = scmp.eq.s32.totalorder %s21, 0
      %p48 = por %p46, %p47
      %s50 = sadd.s32 %s49, 1
      %p53 = scmp.eq.s32.totalorder %s15, 1
      %p54 = scmp.ne.s32.totalorder %s49, %s51
      %p55 = scmp.eq.s32.totalorder %s15, 0
      %p56 = por %p54, %p55
      %p57 = scmp.ne.s32.totalorder %s49, %s51
      %p58 = scmp.eq.s32.totalorder %s20, 1
      %p59 = por %p57, %p58
      %p60 = scmp.ne.s32.totalorder %s51, %s52
      %p61 = scmp.eq.s32.totalorder %s20, 0
      %p62 = por %p60, %p61
      %p63 = scmp.ne.s32.totalorder %s51, %s52
      %p64 = scmp.eq.s32.totalorder %s21, 1
      %p65 = por %p63, %p64
      %p67 = scmp.ne.s32.totalorder %s52, %s66
      %p68 = scmp.eq.s32.totalorder %s21, 0
      %p69 = por %p67, %p68
      %s71 = sadd.s32 %s70, 1
      %p74 = scmp.eq.s32.totalorder %s15, 1
      %p75 = scmp.ne.s32.totalorder %s70, %s72
      %p76 = scmp.eq.s32.totalorder %s15, 0
      %p77 = por %p75, %p76
      %p78 = scmp.ne.s32.totalorder %s70, %s72
      %p79 = scmp.eq.s32.totalorder %s20, 1
      %p80 = por %p78, %p79
      %p81 = scmp.ne.s32.totalorder %s72, %s73
      %p82 = scmp.eq.s32.totalorder %s20, 0
      %p83 = por %p81, %p82
      %p84 = scmp.ne.s32.totalorder %s72, %s73
      %p85 = scmp.eq.s32.totalorder %s21, 1
      %p86 = por %p84, %p85
      %p88 = scmp.ne.s32.totalorder %s73, %s87
      %p89 = scmp.eq.s32.totalorder %s21, 0
      %p90 = por %p88, %p89
      %s92 = sadd.s32 %s91, 1
      %p95 = scmp.eq.s32.totalorder %s15, 1
      %p96 = scmp.ne.s32.totalorder %s91, %s93
      %p97 = scmp.eq.s32.totalorder %s15, 0
      %p98 = por %p96, %p97
      %p99 = scmp.ne.s32.totalorder %s91, %s93
      %p100 = scmp.eq.s32.totalorder %s20, 1
      %p101 = por %p99, %p100
      %p102 = scmp.ne.s32.totalorder %s93, %s94
      %p103 = scmp.eq.s32.totalorder %s20, 0
      %p104 = por %p102, %p103
      %p105 = scmp.ne.s32.totalorder %s93, %s94
      %p106 = scmp.eq.s32.totalorder %s21, 1
      %p107 = por %p105, %p106
      %p109 = scmp.ne.s32.totalorder %s94, %s108
      %p110 = scmp.eq.s32.totalorder %s21, 0
      %p111 = por %p109, %p110
      %s113 = sadd.s32 %s112, 1
      %p116 = scmp.eq.s32.totalorder %s15, 1
      %p117 = scmp.ne.s32.totalorder %s112, %s114
      %p118 = scmp.eq.s32.totalorder %s15, 0
      %p119 = por %p117, %p118
      %p120 = scmp.ne.s32.totalorder %s112, %s114
      %p121 = scmp.eq.s32.totalorder %s20, 1
      %p122 = por %p120, %p121
      %p123 = scmp.ne.s32.totalorder %s114, %s115
      %p124 = scmp.eq.s32.totalorder %s20, 0
      %p125 = por %p123, %p124
      %p126 = scmp.ne.s32.totalorder %s114, %s115
      %p127 = scmp.eq.s32.totalorder %s21, 1
      %p128 = por %p126, %p127
      %p130 = scmp.ne.s32.totalorder %s115, %s129
      %p131 = scmp.eq.s32.totalorder %s21, 0
      %p132 = por %p130, %p131
      %s134 = sadd.s32 %s133, 1
      %p137 = scmp.eq.s32.totalorder %s15, 1
      %p138 = scmp.ne.s32.totalorder %s133, %s135
      %p139 = scmp.eq.s32.totalorder %s15, 0
      %p140 = por %p138, %p139
      %p141 = scmp.ne.s32.totalorder %s133, %s135
      %p142 = scmp.eq.s32.totalorder %s20, 1
      %p143 = por %p141, %p142
      %p144 = scmp.ne.s32.totalorder %s135, %s136
      %p145 = scmp.eq.s32.totalorder %s20, 0
      %p146 = por %p144, %p145
      %p147 = scmp.ne.s32.totalorder %s135, %s136
      %p148 = scmp.eq.s32.totalorder %s21, 1
      %p149 = por %p147, %p148
      %p151 = scmp.ne.s32.totalorder %s136, %s150
      %p152 = scmp.eq.s32.totalorder %s21, 0
      %p153 = por %p151, %p152
      %s154 = ssub.s32 %s15, %s22
      %p155 = scmp.eq.s32.totalorder %s154, 0
      %s157 = sadd.s32 %s156, 1
      %s158 = scalar_select %p155, %s156, %s157
      %p161 = pneg %p155
      %p162 = scmp.eq.s32.totalorder %s15, 1
      %p163 = por %p161, %p162
      %p164 = scmp.ne.s32.totalorder %s156, %s159
      %p165 = scmp.eq.s32.totalorder %s15, 0
      %p166 = por %p164, %p165
      %p167 = scmp.ne.s32.totalorder %s156, %s159
      %p168 = scmp.eq.s32.totalorder %s20, 1
      %p169 = por %p167, %p168
      %p170 = scmp.ne.s32.totalorder %s159, %s160
      %p171 = scmp.eq.s32.totalorder %s20, 0
      %p172 = por %p170, %p171
      %p173 = scmp.ne.s32.totalorder %s159, %s160
      %p174 = scmp.eq.s32.totalorder %s21, 1
      %p175 = por %p173, %p174
      %p177 = scmp.ne.s32.totalorder %s160, %s176
      %p178 = scmp.eq.s32.totalorder %s21, 0
      %p179 = por %p177, %p178
      %p180 = scmp.le.s32.totalorder 1, %s15
      %p181 = scmp.lt.s32.totalorder %s15, 3
      %p182 = pnand %p180, %p181
      %p183 = pneg %p182
      // Predicated region
      $region9: #{temporal_block_forward.1} parent=5 // pred_check
        _
      $region10: #{temporal_block_forward.1} parent=5 // pred_check_branch
        %185 = sbr.rel (%p182) target = $region12
      $region11: #{temporal_block_forward.1} parent=5 // pred_region
        %s186 = ssub.s32 %s15, 1
        // Predicated region
        $region13: #{temporal_block_forward.1} parent=11 // pred_check
          %p187 = pneg %p62
        $region14: #{temporal_block_forward.1} parent=11 // pred_check_branch
          %189 = sbr.rel (%p187) target = $region16
        $region15: #{temporal_block_forward.1} parent=11 // pred_region
          _
        $region16: #{temporal_block_forward.1} parent=11 // pred_fallthru
          _
        // Predicated region
        $region17: #{temporal_block_forward.1} parent=11 // pred_check
          %p190 = pneg %p83
        $region18: #{temporal_block_forward.1} parent=11 // pred_check_branch
          %192 = sbr.rel (%p190) target = $region20
        $region19: #{temporal_block_forward.1} parent=11 // pred_region
          _
        $region20: #{temporal_block_forward.1} parent=11 // pred_fallthru
          _
        // Predicated region
        $region21: #{temporal_block_forward.1} parent=11 // pred_check
          %p193 = pneg %p104
        $region22: #{temporal_block_forward.1} parent=11 // pred_check_branch
          %195 = sbr.rel (%p193) target = $region24
        $region23: #{temporal_block_forward.1} parent=11 // pred_region
          _
        $region24: #{temporal_block_forward.1} parent=11 // pred_fallthru
          _
        // Predicated region
        $region25: #{temporal_block_forward.1} parent=11 // pred_check
          %p196 = pneg %p125
        $region26: #{temporal_block_forward.1} parent=11 // pred_check_branch
          %198 = sbr.rel (%p196) target = $region28
        $region27: #{temporal_block_forward.1} parent=11 // pred_region
          _
        $region28: #{temporal_block_forward.1} parent=11 // pred_fallthru
          _
        // Predicated region
        $region29: #{temporal_block_forward.1} parent=11 // pred_check
          %p199 = pneg %p146
        $region30: #{temporal_block_forward.1} parent=11 // pred_check_branch
          %201 = sbr.rel (%p199) target = $region32
        $region31: #{temporal_block_forward.1} parent=11 // pred_region
          _
        $region32: #{temporal_block_forward.1} parent=11 // pred_fallthru
          _
      $region12: #{temporal_block_forward.1} parent=5 // pred_fallthru
        _
      %p202 = scmp.lt.s32.totalorder %s15, 2
      // Predicated region
      $region33: #{temporal_block_forward.1} parent=5 // pred_check
        %p203 = pneg %p202
      $region34: #{temporal_block_forward.1} parent=5 // pred_check_branch
        %205 = sbr.rel (%p203) target = $region36
      $region35: #{temporal_block_forward.1} parent=5 // pred_region
        // Predicated region
        $region37: #{temporal_block_forward.1} parent=35 // pred_check
          %p206 = pneg %p35
        $region38: #{temporal_block_forward.1} parent=35 // pred_check_branch
          %208 = sbr.rel (%p206) target = $region40
        $region39: #{temporal_block_forward.1} parent=35 // pred_region
          %p209 = scmp.lt.s32.totalorder %s15, 1
          %s210 = scalar_select %p209, %s15, 1
          %s211 = smul.addr %s210, 4
          %s212 = scalar_lea.vmem %s0, %s211
        $region40: #{temporal_block_forward.1} parent=35 // pred_fallthru
          _
      $region36: #{temporal_block_forward.1} parent=5 // pred_fallthru
        _
      %p213 = scmp.le.s32.totalorder 1, %s15
      %p214 = scmp.lt.s32.totalorder %s15, 3
      %p215 = pnand %p213, %p214
      %p216 = pneg %p215
      // Predicated region
      $region41: #{temporal_block_forward.1} parent=5 // pred_check
        _
      $region42: #{temporal_block_forward.1} parent=5 // pred_check_branch
        %218 = sbr.rel (%p215) target = $region44
      $region43: #{temporal_block_forward.1} parent=5 // pred_region
        %s219 = ssub.s32 %s15, 1
        %p220 = scmp.lt.s32.totalorder %s20, 1
        %s221 = scalar_select %p220, %s20, 1
        %s222 = smul.addr %s221, 4
        %s223 = scalar_lea.vmem %s0, %s222
        %p224 = pneg %p41
        %p225 = pneg %p38
        %p226 = pneg %p62
        %p227 = pneg %p59
        %p228 = pneg %p83
        %p229 = pneg %p80
        %p230 = pneg %p104
        %p231 = pneg %p101
        %p232 = pneg %p125
        %p233 = pneg %p122
        %p234 = pneg %p146
        %p235 = pneg %p143
        %p236 = pneg %p172
        %p237 = pneg %p169
        %s238 = sand.u32 %s159, 1
        %s239 = scalar_lea.sflag [#allocation4], %s238
        %s240 = sand.u32 %s159, 1
        %s241 = smul.addr %s240, 8
        %s242 = scalar_lea.vmem [#allocation3], %s241
        %p243 = scmp.lt.s32.totalorder %s20, 1
        %s244 = scalar_select %p243, %s20, 1
        %s245 = smul.addr %s244, 4
        %s246 = scalar_lea.vmem %s0, %s245
        %v247 = vld [vmem:[%s246] sm:$0xf]
        %v248 = vld [vmem:[%s2] sm:$0xff]
        %s249 = scalar_lea.vmem %s2, 8
        %v250 = vld [vmem:[%s249] sm:$0xff]
        %252 = vrot.lane.b32.xlu0 %v247, 126
        %v253 = vpop.permute.xlu0 %252
        %vm254 = vcmask 31744
        %v256 = vsel %vm254, %v250, 0
        %vm258 = vcmask 1043456
        %v259 = vsel %vm258, %v253, 0
        %261 = vmatprep.subr.mxu0 0.0
        %262 = vmatpush1.msra.mxu0 %v259
        %263 = vmatprep.subr.mxu0 0.0
        %264 = vmatpush1.msra.mxu0 0.0
        %265 = vmatprep.subr.mxu0 0.0
        %266 = vmatpush1.msra.mxu0 0.0
        %267 = vmatprep.subr.mxu0 0.0
        %268 = vmatpush1.msra.mxu0 0.0
        %269 = vmatprep.subr.mxu0 0.0
        %270 = vmatpush1.msra.mxu0 0.0
        %271 = vmatprep.subr.mxu0 0.0
        %272 = vmatpush1.msra.mxu0 0.0
        %273 = vmatprep.subr.mxu0 0.0
        %274 = vmatpush1.msra.mxu0 0.0
        %275 = vmatprep.subr.mxu0 0.0
        %276 = vmatpush1.msra.mxu0 0.0
        %277 = vmatprep.subr.mxu0 0.0
        %278 = vmatpush1.msra.mxu0 0.0
        %279 = vmatprep.subr.mxu0 0.0
        %280 = vmatpush1.msra.mxu0 0.0
        %281 = vmatprep.subr.mxu0 0.0
        %282 = vmatpush1.msra.mxu0 0.0
        %283 = vmatprep.subr.mxu0 0.0
        %284 = vmatpush1.msra.mxu0 0.0
        %285 = vmatprep.subr.mxu0 0.0
        %286 = vmatpush1.msra.mxu0 0.0
        %287 = vmatprep.subr.mxu0 0.0
        %288 = vmatpush1.msra.mxu0 0.0
        %289 = vmatprep.subr.mxu0 0.0
        %290 = vmatpush1.msra.mxu0 0.0
        %291 = vmatprep.subr.mxu0 0.0
        %292 = vmatpush1.msra.mxu0 0.0
        %293 = vmatprep.subr.mxu0 0.0
        %294 = vmatpush1.msra.mxu0 0.0
        %295 = vmatprep.subr.mxu0 0.0
        %296 = vmatpush1.msra.mxu0 0.0
        %297 = vmatprep.subr.mxu0 0.0
        %298 = vmatpush1.msra.mxu0 0.0
        %299 = vmatprep.subr.mxu0 0.0
        %300 = vmatpush1.msra.mxu0 0.0
        %301 = vmatprep.subr.mxu0 0.0
        %302 = vmatpush1.msra.mxu0 0.0
        %303 = vmatprep.subr.mxu0 0.0
        %304 = vmatpush1.msra.mxu0 0.0
        %305 = vmatprep.subr.mxu0 0.0
        %306 = vmatpush1.msra.mxu0 0.0
        %307 = vmatprep.subr.mxu0 0.0
        %308 = vmatpush1.msra.mxu0 0.0
        %309 = vmatprep.subr.mxu0 0.0
        %310 = vmatpush1.msra.mxu0 0.0
        %311 = vmatprep.subr.mxu0 0.0
        %312 = vmatpush1.msra.mxu0 0.0
        %313 = vmatprep.subr.mxu0 0.0
        %314 = vmatpush1.msra.mxu0 0.0
        %315 = vmatprep.subr.mxu0 0.0
        %316 = vmatpush1.msra.mxu0 0.0
        %317 = vmatprep.subr.mxu0 0.0
        %318 = vmatpush1.msra.mxu0 0.0
        %319 = vmatprep.subr.mxu0 0.0
        %320 = vmatpush1.msra.mxu0 0.0
        %321 = vmatprep.subr.mxu0 0.0
        %322 = vmatpush1.msra.mxu0 0.0
        %323 = vmatprep.subr.mxu0 0.0
        %324 = vmatpush1.msra.mxu0 0.0
        %325 = vmatprep.mubr.f32.mxu0 0.0
        %326 = vmatmul.mubr.f32.gmra.mrb[0].mxu0 %v256
        %v327 = vpop.f32.mrb[0].mxu0
        %v328 = vadd.f32 0.0, %v327
        %v329 = vpop.f32.mrb[0].mxu0
        %330 = vdwg.mxu0
        %v332 = vsel %vm254, %v248, 0
        %v334 = vsel %vm258, %v247, 0
        %336 = vmatprep.subr.mxu0 0.0
        %337 = vmatpush1.msra.mxu0 %v334
        %338 = vmatprep.subr.mxu0 0.0
        %339 = vmatpush1.msra.mxu0 0.0
        %340 = vmatprep.subr.mxu0 0.0
        %341 = vmatpush1.msra.mxu0 0.0
        %342 = vmatprep.subr.mxu0 0.0
        %343 = vmatpush1.msra.mxu0 0.0
        %344 = vmatprep.subr.mxu0 0.0
        %345 = vmatpush1.msra.mxu0 0.0
        %346 = vmatprep.subr.mxu0 0.0
        %347 = vmatpush1.msra.mxu0 0.0
        %348 = vmatprep.subr.mxu0 0.0
        %349 = vmatpush1.msra.mxu0 0.0
        %350 = vmatprep.subr.mxu0 0.0
        %351 = vmatpush1.msra.mxu0 0.0
        %352 = vmatprep.subr.mxu0 0.0
        %353 = vmatpush1.msra.mxu0 0.0
        %354 = vmatprep.subr.mxu0 0.0
        %355 = vmatpush1.msra.mxu0 0.0
        %356 = vmatprep.subr.mxu0 0.0
        %357 = vmatpush1.msra.mxu0 0.0
        %358 = vmatprep.subr.mxu0 0.0
        %359 = vmatpush1.msra.mxu0 0.0
        %360 = vmatprep.subr.mxu0 0.0
        %361 = vmatpush1.msra.mxu0 0.0
        %362 = vmatprep.subr.mxu0 0.0
        %363 = vmatpush1.msra.mxu0 0.0
        %364 = vmatprep.subr.mxu0 0.0
        %365 = vmatpush1.msra.mxu0 0.0
        %366 = vmatprep.subr.mxu0 0.0
        %367 = vmatpush1.msra.mxu0 0.0
        %368 = vmatprep.subr.mxu0 0.0
        %369 = vmatpush1.msra.mxu0 0.0
        %370 = vmatprep.subr.mxu0 0.0
        %371 = vmatpush1.msra.mxu0 0.0
        %372 = vmatprep.subr.mxu0 0.0
        %373 = vmatpush1.msra.mxu0 0.0
        %374 = vmatprep.subr.mxu0 0.0
        %375 = vmatpush1.msra.mxu0 0.0
        %376 = vmatprep.subr.mxu0 0.0
        %377 = vmatpush1.msra.mxu0 0.0
        %378 = vmatprep.subr.mxu0 0.0
        %379 = vmatpush1.msra.mxu0 0.0
        %380 = vmatprep.subr.mxu0 0.0
        %381 = vmatpush1.msra.mxu0 0.0
        %382 = vmatprep.subr.mxu0 0.0
        %383 = vmatpush1.msra.mxu0 0.0
        %384 = vmatprep.subr.mxu0 0.0
        %385 = vmatpush1.msra.mxu0 0.0
        %386 = vmatprep.subr.mxu0 0.0
        %387 = vmatpush1.msra.mxu0 0.0
        %388 = vmatprep.subr.mxu0 0.0
        %389 = vmatpush1.msra.mxu0 0.0
        %390 = vmatprep.subr.mxu0 0.0
        %391 = vmatpush1.msra.mxu0 0.0
        %392 = vmatprep.subr.mxu0 0.0
        %393 = vmatpush1.msra.mxu0 0.0
        %394 = vmatprep.subr.mxu0 0.0
        %395 = vmatpush1.msra.mxu0 0.0
        %396 = vmatprep.subr.mxu0 0.0
        %397 = vmatpush1.msra.mxu0 0.0
        %398 = vmatprep.subr.mxu0 0.0
        %399 = vmatpush1.msra.mxu0 0.0
        %400 = vmatprep.mubr.f32.mxu0 0.0
        %401 = vmatmul.mubr.f32.gmra.mrb[0].mxu0 %v332
        %v402 = vpop.f32.mrb[0].mxu0
        %v403 = vadd.f32 %v328, %v402
        %v404 = vpop.f32.mrb[0].mxu0
        %405 = vdwg.mxu0
        %s406 = scalar_lea.vmem %s2, 16
        %v407 = vld [vmem:[%s406] sm:$0xff]
        %408 = vrot.lane.b32.xlu0 %v247, 124
        %v409 = vpop.permute.xlu0 %408
        %v411 = vsel %vm254, %v407, 0
        %v413 = vsel %vm258, %v409, 0
        %415 = vmatprep.subr.mxu0 0.0
        %416 = vmatpush1.msra.mxu0 %v413
        %417 = vmatprep.subr.mxu0 0.0
        %418 = vmatpush1.msra.mxu0 0.0
        %419 = vmatprep.subr.mxu0 0.0
        %420 = vmatpush1.msra.mxu0 0.0
        %421 = vmatprep.subr.mxu0 0.0
        %422 = vmatpush1.msra.mxu0 0.0
        %423 = vmatprep.subr.mxu0 0.0
        %424 = vmatpush1.msra.mxu0 0.0
        %425 = vmatprep.subr.mxu0 0.0
        %426 = vmatpush1.msra.mxu0 0.0
        %427 = vmatprep.subr.mxu0 0.0
        %428 = vmatpush1.msra.mxu0 0.0
        %429 = vmatprep.subr.mxu0 0.0
        %430 = vmatpush1.msra.mxu0 0.0
        %431 = vmatprep.subr.mxu0 0.0
        %432 = vmatpush1.msra.mxu0 0.0
        %433 = vmatprep.subr.mxu0 0.0
        %434 = vmatpush1.msra.mxu0 0.0
        %435 = vmatprep.subr.mxu0 0.0
        %436 = vmatpush1.msra.mxu0 0.0
        %437 = vmatprep.subr.mxu0 0.0
        %438 = vmatpush1.msra.mxu0 0.0
        %439 = vmatprep.subr.mxu0 0.0
        %440 = vmatpush1.msra.mxu0 0.0
        %441 = vmatprep.subr.mxu0 0.0
        %442 = vmatpush1.msra.mxu0 0.0
        %443 = vmatprep.subr.mxu0 0.0
        %444 = vmatpush1.msra.mxu0 0.0
        %445 = vmatprep.subr.mxu0 0.0
        %446 = vmatpush1.msra.mxu0 0.0
        %447 = vmatprep.subr.mxu0 0.0
        %448 = vmatpush1.msra.mxu0 0.0
        %449 = vmatprep.subr.mxu0 0.0
        %450 = vmatpush1.msra.mxu0 0.0
        %451 = vmatprep.subr.mxu0 0.0
        %452 = vmatpush1.msra.mxu0 0.0
        %453 = vmatprep.subr.mxu0 0.0
        %454 = vmatpush1.msra.mxu0 0.0
        %455 = vmatprep.subr.mxu0 0.0
        %456 = vmatpush1.msra.mxu0 0.0
        %457 = vmatprep.subr.mxu0 0.0
        %458 = vmatpush1.msra.mxu0 0.0
        %459 = vmatprep.subr.mxu0 0.0
        %460 = vmatpush1.msra.mxu0 0.0
        %461 = vmatprep.subr.mxu0 0.0
        %462 = vmatpush1.msra.mxu0 0.0
        %463 = vmatprep.subr.mxu0 0.0
        %464 = vmatpush1.msra.mxu0 0.0
        %465 = vmatprep.subr.mxu0 0.0
        %466 = vmatpush1.msra.mxu0 0.0
        %467 = vmatprep.subr.mxu0 0.0
        %468 = vmatpush1.msra.mxu0 0.0
        %469 = vmatprep.subr.mxu0 0.0
        %470 = vmatpush1.msra.mxu0 0.0
        %471 = vmatprep.subr.mxu0 0.0
        %472 = vmatpush1.msra.mxu0 0.0
        %473 = vmatprep.subr.mxu0 0.0
        %474 = vmatpush1.msra.mxu0 0.0
        %475 = vmatprep.subr.mxu0 0.0
        %476 = vmatpush1.msra.mxu0 0.0
        %477 = vmatprep.subr.mxu0 0.0
        %478 = vmatpush1.msra.mxu0 0.0
        %479 = vmatprep.mubr.f32.mxu0 0.0
        %480 = vmatmul.mubr.f32.gmra.mrb[0].mxu0 %v411
        %v481 = vpop.f32.mrb[0].mxu0
        %v482 = vadd.f32 0.0, %v481
        %v483 = vpop.f32.mrb[0].mxu0
        %484 = vdwg.mxu0
        %v485 = vadd.f32 %v403, %v482
        %v486 = vld [vmem:[%s3] sm:$0xff]
        %488 = vset.pattern.permute.xlu0 0
        %489 = vperm.xlu0 %488, %v486
        %v490 = vpop.permute.xlu0 %489
        %v492 = vadd.f32 %v485, %v490
        %v493 = vmax.f32 %v492, 0.0
        %v494 = vld [vmem:[%s1] sm:$0x1]
        %vm495 = vcmp.gt.f32.partialorder %v494, 0.5
        %v496 = vsel %vm495, 1, 0
        %v497 = vlaneseq
        %v498 = vshrl.u32 %v497, 7
        %v499 = vsub.s32 0, %v498
        %v500 = vrot.slane %v496, %v499
        %vm501 = vcmp.eq.s32.totalorder %v500, 1
        %v502 = vsel %vm501, %v493, 0.0
        %504 = vrot.lane.b32.xlu0 %v502, 4
        %v505 = vpop.permute.xlu0 %504
        %vm507 = vcmask 195616
        %508 = vst.msk [vmem:[#allocation2] sm:$0xff] %vm507, %v505
        %509 = vst.msk [vmem:[#allocation2] sm:$0xff] %vm254, 0.0
        %vm510 = vcmask 261312
        %511 = vst.msk [vmem:[#allocation2] sm:$0xff] %vm510, 0.0
        %v512 = vld [vmem:[#allocation2] sm:$0xff]
        %v513 = vld [vmem:[%s4] sm:$0xff]
        %s514 = scalar_lea.vmem %s4, 8
        %v515 = vld [vmem:[%s514] sm:$0xff]
        %517 = vrot.lane.b32.xlu0 %v512, 126
        %v518 = vpop.permute.xlu0 %517
        %vm520 = vcmask 64512
        %v522 = vsel %vm520, %v515, 0
        %524 = vmatprep.subr.mxu0 0.0
        %525 = vmatpush1.msra.mxu0 %v518
        %526 = vmatprep.subr.mxu0 0.0
        %527 = vmatpush1.msra.mxu0 0.0
        %528 = vmatprep.subr.mxu0 0.0
        %529 = vmatpush1.msra.mxu0 0.0
        %530 = vmatprep.subr.mxu0 0.0
        %531 = vmatpush1.msra.mxu0 0.0
        %532 = vmatprep.subr.mxu0 0.0
        %533 = vmatpush1.msra.mxu0 0.0
        %534 = vmatprep.subr.mxu0 0.0
        %535 = vmatpush1.msra.mxu0 0.0
        %536 = vmatprep.subr.mxu0 0.0
        %537 = vmatpush1.msra.mxu0 0.0
        %538 = vmatprep.subr.mxu0 0.0
        %539 = vmatpush1.msra.mxu0 0.0
        %540 = vmatprep.subr.mxu0 0.0
        %541 = vmatpush1.msra.mxu0 0.0
        %542 = vmatprep.subr.mxu0 0.0
        %543 = vmatpush1.msra.mxu0 0.0
        %544 = vmatprep.subr.mxu0 0.0
        %545 = vmatpush1.msra.mxu0 0.0
        %546 = vmatprep.subr.mxu0 0.0
        %547 = vmatpush1.msra.mxu0 0.0
        %548 = vmatprep.subr.mxu0 0.0
        %549 = vmatpush1.msra.mxu0 0.0
        %550 = vmatprep.subr.mxu0 0.0
        %551 = vmatpush1.msra.mxu0 0.0
        %552 = vmatprep.subr.mxu0 0.0
        %553 = vmatpush1.msra.mxu0 0.0
        %554 = vmatprep.subr.mxu0 0.0
        %555 = vmatpush1.msra.mxu0 0.0
        %556 = vmatprep.subr.mxu0 0.0
        %557 = vmatpush1.msra.mxu0 0.0
        %558 = vmatprep.subr.mxu0 0.0
        %559 = vmatpush1.msra.mxu0 0.0
        %560 = vmatprep.subr.mxu0 0.0
        %561 = vmatpush1.msra.mxu0 0.0
        %562 = vmatprep.subr.mxu0 0.0
        %563 = vmatpush1.msra.mxu0 0.0
        %564 = vmatprep.subr.mxu0 0.0
        %565 = vmatpush1.msra.mxu0 0.0
        %566 = vmatprep.subr.mxu0 0.0
        %567 = vmatpush1.msra.mxu0 0.0
        %568 = vmatprep.subr.mxu0 0.0
        %569 = vmatpush1.msra.mxu0 0.0
        %570 = vmatprep.subr.mxu0 0.0
        %571 = vmatpush1.msra.mxu0 0.0
        %572 = vmatprep.subr.mxu0 0.0
        %573 = vmatpush1.msra.mxu0 0.0
        %574 = vmatprep.subr.mxu0 0.0
        %575 = vmatpush1.msra.mxu0 0.0
        %576 = vmatprep.subr.mxu0 0.0
        %577 = vmatpush1.msra.mxu0 0.0
        %578 = vmatprep.subr.mxu0 0.0
        %579 = vmatpush1.msra.mxu0 0.0
        %580 = vmatprep.subr.mxu0 0.0
        %581 = vmatpush1.msra.mxu0 0.0
        %582 = vmatprep.subr.mxu0 0.0
        %583 = vmatpush1.msra.mxu0 0.0
        %584 = vmatprep.subr.mxu0 0.0
        %585 = vmatpush1.msra.mxu0 0.0
        %586 = vmatprep.subr.mxu0 0.0
        %587 = vmatpush1.msra.mxu0 0.0
        %588 = vmatprep.mubr.f32.mxu0 0.0
        %589 = vmatmul.mubr.f32.gmra.mrb[0].mxu0 %v522
        %v590 = vpop.f32.mrb[0].mxu0
        %v591 = vadd.f32 0.0, %v590
        %v592 = vpop.f32.mrb[0].mxu0
        %593 = vdwg.mxu0
        %v595 = vsel %vm520, %v513, 0
        %597 = vmatprep.subr.mxu0 0.0
        %598 = vmatpush1.msra.mxu0 %v512
        %599 = vmatprep.subr.mxu0 0.0
        %600 = vmatpush1.msra.mxu0 0.0
        %601 = vmatprep.subr.mxu0 0.0
        %602 = vmatpush1.msra.mxu0 0.0
        %603 = vmatprep.subr.mxu0 0.0
        %604 = vmatpush1.msra.mxu0 0.0
        %605 = vmatprep.subr.mxu0 0.0
        %606 = vmatpush1.msra.mxu0 0.0
        %607 = vmatprep.subr.mxu0 0.0
        %608 = vmatpush1.msra.mxu0 0.0
        %609 = vmatprep.subr.mxu0 0.0
        %610 = vmatpush1.msra.mxu0 0.0
        %611 = vmatprep.subr.mxu0 0.0
        %612 = vmatpush1.msra.mxu0 0.0
        %613 = vmatprep.subr.mxu0 0.0
        %614 = vmatpush1.msra.mxu0 0.0
        %615 = vmatprep.subr.mxu0 0.0
        %616 = vmatpush1.msra.mxu0 0.0
        %617 = vmatprep.subr.mxu0 0.0
        %618 = vmatpush1.msra.mxu0 0.0
        %619 = vmatprep.subr.mxu0 0.0
        %620 = vmatpush1.msra.mxu0 0.0
        %621 = vmatprep.subr.mxu0 0.0
        %622 = vmatpush1.msra.mxu0 0.0
        %623 = vmatprep.subr.mxu0 0.0
        %624 = vmatpush1.msra.mxu0 0.0
        %625 = vmatprep.subr.mxu0 0.0
        %626 = vmatpush1.msra.mxu0 0.0
        %627 = vmatprep.subr.mxu0 0.0
        %628 = vmatpush1.msra.mxu0 0.0
        %629 = vmatprep.subr.mxu0 0.0
        %630 = vmatpush1.msra.mxu0 0.0
        %631 = vmatprep.subr.mxu0 0.0
        %632 = vmatpush1.msra.mxu0 0.0
        %633 = vmatprep.subr.mxu0 0.0
        %634 = vmatpush1.msra.mxu0 0.0
        %635 = vmatprep.subr.mxu0 0.0
        %636 = vmatpush1.msra.mxu0 0.0
        %637 = vmatprep.subr.mxu0 0.0
        %638 = vmatpush1.msra.mxu0 0.0
        %639 = vmatprep.subr.mxu0 0.0
        %640 = vmatpush1.msra.mxu0 0.0
        %641 = vmatprep.subr.mxu0 0.0
        %642 = vmatpush1.msra.mxu0 0.0
        %643 = vmatprep.subr.mxu0 0.0
        %644 = vmatpush1.msra.mxu0 0.0
        %645 = vmatprep.subr.mxu0 0.0
        %646 = vmatpush1.msra.mxu0 0.0
        %647 = vmatprep.subr.mxu0 0.0
        %648 = vmatpush1.msra.mxu0 0.0
        %649 = vmatprep.subr.mxu0 0.0
        %650 = vmatpush1.msra.mxu0 0.0
        %651 = vmatprep.subr.mxu0 0.0
        %652 = vmatpush1.msra.mxu0 0.0
        %653 = vmatprep.subr.mxu0 0.0
        %654 = vmatpush1.msra.mxu0 0.0
        %655 = vmatprep.subr.mxu0 0.0
        %656 = vmatpush1.msra.mxu0 0.0
        %657 = vmatprep.subr.mxu0 0.0
        %658 = vmatpush1.msra.mxu0 0.0
        %659 = vmatprep.subr.mxu0 0.0
        %660 = vmatpush1.msra.mxu0 0.0
        %661 = vmatprep.mubr.f32.mxu0 0.0
        %662 = vmatmul.mubr.f32.gmra.mrb[0].mxu0 %v595
        %v663 = vpop.f32.mrb[0].mxu0
        %v664 = vadd.f32 %v591, %v663
        %v665 = vpop.f32.mrb[0].mxu0
        %666 = vdwg.mxu0
        %s667 = scalar_lea.vmem %s4, 16
        %v668 = vld [vmem:[%s667] sm:$0xff]
        %669 = vrot.lane.b32.xlu0 %v512, 124
        %v670 = vpop.permute.xlu0 %669
        %v673 = vsel %vm520, %v668, 0
        %675 = vmatprep.subr.mxu0 0.0
        %676 = vmatpush1.msra.mxu0 %v670
        %677 = vmatprep.subr.mxu0 0.0
        %678 = vmatpush1.msra.mxu0 0.0
        %679 = vmatprep.subr.mxu0 0.0
        %680 = vmatpush1.msra.mxu0 0.0
        %681 = vmatprep.subr.mxu0 0.0
        %682 = vmatpush1.msra.mxu0 0.0
        %683 = vmatprep.subr.mxu0 0.0
        %684 = vmatpush1.msra.mxu0 0.0
        %685 = vmatprep.subr.mxu0 0.0
        %686 = vmatpush1.msra.mxu0 0.0
        %687 = vmatprep.subr.mxu0 0.0
        %688 = vmatpush1.msra.mxu0 0.0
        %689 = vmatprep.subr.mxu0 0.0
        %690 = vmatpush1.msra.mxu0 0.0
        %691 = vmatprep.subr.mxu0 0.0
        %692 = vmatpush1.msra.mxu0 0.0
        %693 = vmatprep.subr.mxu0 0.0
        %694 = vmatpush1.msra.mxu0 0.0
        %695 = vmatprep.subr.mxu0 0.0
        %696 = vmatpush1.msra.mxu0 0.0
        %697 = vmatprep.subr.mxu0 0.0
        %698 = vmatpush1.msra.mxu0 0.0
        %699 = vmatprep.subr.mxu0 0.0
        %700 = vmatpush1.msra.mxu0 0.0
        %701 = vmatprep.subr.mxu0 0.0
        %702 = vmatpush1.msra.mxu0 0.0
        %703 = vmatprep.subr.mxu0 0.0
        %704 = vmatpush1.msra.mxu0 0.0
        %705 = vmatprep.subr.mxu0 0.0
        %706 = vmatpush1.msra.mxu0 0.0
        %707 = vmatprep.subr.mxu0 0.0
        %708 = vmatpush1.msra.mxu0 0.0
        %709 = vmatprep.subr.mxu0 0.0
        %710 = vmatpush1.msra.mxu0 0.0
        %711 = vmatprep.subr.mxu0 0.0
        %712 = vmatpush1.msra.mxu0 0.0
        %713 = vmatprep.subr.mxu0 0.0
        %714 = vmatpush1.msra.mxu0 0.0
        %715 = vmatprep.subr.mxu0 0.0
        %716 = vmatpush1.msra.mxu0 0.0
        %717 = vmatprep.subr.mxu0 0.0
        %718 = vmatpush1.msra.mxu0 0.0
        %719 = vmatprep.subr.mxu0 0.0
        %720 = vmatpush1.msra.mxu0 0.0
        %721 = vmatprep.subr.mxu0 0.0
        %722 = vmatpush1.msra.mxu0 0.0
        %723 = vmatprep.subr.mxu0 0.0
        %724 = vmatpush1.msra.mxu0 0.0
        %725 = vmatprep.subr.mxu0 0.0
        %726 = vmatpush1.msra.mxu0 0.0
        %727 = vmatprep.subr.mxu0 0.0
        %728 = vmatpush1.msra.mxu0 0.0
        %729 = vmatprep.subr.mxu0 0.0
        %730 = vmatpush1.msra.mxu0 0.0
        %731 = vmatprep.subr.mxu0 0.0
        %732 = vmatpush1.msra.mxu0 0.0
        %733 = vmatprep.subr.mxu0 0.0
        %734 = vmatpush1.msra.mxu0 0.0
        %735 = vmatprep.subr.mxu0 0.0
        %736 = vmatpush1.msra.mxu0 0.0
        %737 = vmatprep.subr.mxu0 0.0
        %738 = vmatpush1.msra.mxu0 0.0
        %739 = vmatprep.mubr.f32.mxu0 0.0
        %740 = vmatmul.mubr.f32.gmra.mrb[0].mxu0 %v673
        %v741 = vpop.f32.mrb[0].mxu0
        %v742 = vadd.f32 0.0, %v741
        %v743 = vpop.f32.mrb[0].mxu0
        %744 = vdwg.mxu0
        %v745 = vadd.f32 %v664, %v742
        %v746 = vld [vmem:[%s5] sm:$0xff]
        %748 = vset.pattern.permute.xlu0 0
        %749 = vperm.xlu0 %748, %v746
        %v750 = vpop.permute.xlu0 %749
        %v752 = vadd.f32 %v745, %v750
        %v753 = vmax.f32 %v752, 0.0
        %vm754 = vcmask 228352
        %755 = vst.msk [vmem:[%s242] sm:$0xff] %vm754, %v753
        %s756 = sand.u32 %s159, 1
        %s757 = scalar_lea.sflag [#allocation4], %s756
        %s758 = sand.u32 %s159, 1
        %s759 = smul.addr %s758, 8
        %s760 = scalar_lea.vmem [#allocation3], %s759
        // Predicated region
        $region45: #{temporal_block_forward.1} parent=43 // pred_check
          %p761 = pneg %p169
        $region46: #{temporal_block_forward.1} parent=43 // pred_check_branch
          %763 = sbr.rel (%p761) target = $region48
        $region47: #{temporal_block_forward.1} parent=43 // pred_region
          %s765 = ssub.s32 128, 128
          %766 = vsyncadd %s757, %s765
          %s767 = smul.addr %s20, 128
          %s768 = scalar_lea.hbm %s6, %s767
          %s770 = sshll.u32 %s760, 4
          %s771 = int_to_ptr.vmem [resolvable:$true] %s770
          %773 = dma.vmem_to_hbm [thread:$0]  %s771, 128, %s768, %s757
        $region48: #{temporal_block_forward.1} parent=43 // pred_fallthru
          _
      $region44: #{temporal_block_forward.1} parent=5 // pred_fallthru
        _
      %p774 = scmp.le.s32.totalorder 2, %s15
      // Predicated region
      $region49: #{temporal_block_forward.1} parent=5 // pred_check
        %p775 = pneg %p774
      $region50: #{temporal_block_forward.1} parent=5 // pred_check_branch
        %777 = sbr.rel (%p775) target = $region52
      $region51: #{temporal_block_forward.1} parent=5 // pred_region
        %s778 = ssub.s32 %s15, 2
        // Predicated region
        $region53: #{temporal_block_forward.1} parent=51 // pred_check
          %p779 = pneg %p175
        $region54: #{temporal_block_forward.1} parent=51 // pred_check_branch
          %781 = sbr.rel (%p779) target = $region56
        $region55: #{temporal_block_forward.1} parent=51 // pred_region
          %s782 = sand.u32 %s160, 1
          %s783 = scalar_lea.sflag [#allocation4], %s782
          %s784 = sand.u32 %s160, 1
          %s785 = smul.addr %s784, 8
          %s786 = scalar_lea.vmem [#allocation3], %s785
          %787 = dma.done %s783, 128
        $region56: #{temporal_block_forward.1} parent=51 // pred_fallthru
          _
      $region52: #{temporal_block_forward.1} parent=5 // pred_fallthru
        _
    $region6: #{temporal_block_forward.1} parent=1 // loop_footer
      %s19 = sadd.s32 1, %s15
    $region7: #{temporal_block_forward.1} parent=1 // loop_footer_branch
      %14 = sbr.rel target = $region3
    $region8: #{temporal_block_forward.1} parent=1 // loop_exit
      _
    %788 = vsyncpa [#allocation4], 1
    %s789 = scalar_lea.sflag [#allocation4], 1
    %790 = vsyncpa %s789, 1

</llo_original>
